<compile_context>
chip_gen: v7x
topology: tpu7x:2x2x1
jax: 0.10.0
libtpu: 0.0.40
codegen_flags: <defaults>
</compile_context>

<pallas_src>
import functools

import jax
import jax.numpy as jnp
from jax.experimental import pallas as pl
from jax.experimental.pallas import tpu as pltpu


def _round_up(a, b):
    return ((a + b - 1) // b) * b


def _patch_embed_kernel(x_ref, w_ref, b_ref, o_ref, acc_ref):
    # x_ref  : (TM, TK)     bf16 patch tile          (pipelined over M and K)
    # w_ref  : (TK, Dp)     bf16 flattened weight    (resident across M tiles)
    # b_ref  : (1, Dp)      f32 bias                 (resident)
    # o_ref  : (TM, Dp)     output tile              (resident across K tiles)
    # acc_ref: (TM, Dp)     f32 accumulator scratch
    k = pl.program_id(1)

    @pl.when(k == 0)
    def _():
        acc_ref[...] = jnp.zeros_like(acc_ref)

    acc_ref[...] += jnp.dot(x_ref[...], w_ref[...],
                            preferred_element_type=jnp.float32)

    @pl.when(k == pl.num_programs(1) - 1)
    def _():
        o_ref[...] = (acc_ref[...] + b_ref[...]).astype(o_ref.dtype)


def patch_embedding(x, weight, bias, patch_size, *, tm_target=512, tk_target=512,
                    compute_dtype=jnp.bfloat16):
    """x: [B, C, H, W] (NCHW). weight: [D, C, P, P] (OIHW). bias: [D].

    Returns [B, num_patches, D], matching PatchEmbedding.forward.
    """
    B, C, H, W = x.shape
    D = weight.shape[0]
    P = patch_size
    Hp, Wp = H // P, W // P
    N = Hp * Wp
    K = C * P * P
    M = B * N
    out_dtype = x.dtype

    # Lane-dense padding of contraction / output-feature dims.
    K_pad = _round_up(K, 128)
    D_pad = _round_up(D, 128)

    # K tiling (only kicks in for large patches).
    if K_pad <= tk_target:
        TK = K_pad
    else:
        TK = tk_target
        K_pad = _round_up(K_pad, TK)

    # M tiling: sublane-aligned tiles of at most tm_target rows.
    M8 = _round_up(M, 8)
    if M8 <= tm_target:
        TM = M8
        M_pad = M8
    else:
        TM = tm_target
        M_pad = _round_up(M, TM)

    # Patch extraction: (C, P, P)-major flatten matches the OIHW weight flatten.
    # allow_input_fusion lets XLA fold this transpose/pad/cast into the Pallas operand.
    patches = x.reshape(B, C, Hp, P, Wp, P)
    patches = patches.transpose(0, 2, 4, 1, 3, 5).reshape(M, K)
    patches = patches.astype(compute_dtype)
    patches = jnp.pad(patches, ((0, M_pad - M), (0, K_pad - K)))

    w_flat = weight.reshape(D, K).T.astype(compute_dtype)              # [K, D]
    w_flat = jnp.pad(w_flat, ((0, K_pad - K), (0, D_pad - D)))
    b_flat = jnp.pad(bias.astype(jnp.float32), (0, D_pad - D)).reshape(1, D_pad)

    grid = (M_pad // TM, K_pad // TK)

    in_bytes = jnp.dtype(compute_dtype).itemsize
    out_bytes = jnp.dtype(out_dtype).itemsize
    # Double-buffered x tiles + double-buffered weight tiles + out tiles
    # + resident bias + f32 accumulator scratch.
    vmem_bytes = (2 * TM * TK * in_bytes
                  + 2 * TK * D_pad * in_bytes
                  + 2 * TM * D_pad * out_bytes
                  + 2 * D_pad * 4
                  + TM * D_pad * 4)
    vmem_limit = int(min(max(2 * vmem_bytes, 16 * 1024 * 1024), 48 * 1024 * 1024))

    cost = pl.CostEstimate(
        flops=2 * M_pad * K_pad * D_pad,
        transcendentals=0,
        bytes_accessed=(M_pad * K_pad * in_bytes
                        + K_pad * D_pad * in_bytes
                        + M_pad * D_pad * out_bytes),
    )

    out = pl.pallas_call(
        _patch_embed_kernel,
        out_shape=jax.ShapeDtypeStruct((M_pad, D_pad), out_dtype),
        grid_spec=pltpu.PrefetchScalarGridSpec(
            num_scalar_prefetch=0,
            grid=grid,
            in_specs=[
                pl.BlockSpec((TM, TK), lambda i, k: (i, k)),      # patch tile
                pl.BlockSpec((TK, D_pad), lambda i, k: (k, 0)),   # weight tile
                pl.BlockSpec((1, D_pad), lambda i, k: (0, 0)),    # bias (resident)
            ],
            out_specs=pl.BlockSpec((TM, D_pad), lambda i, k: (i, 0)),
            scratch_shapes=[pltpu.VMEM((TM, D_pad), jnp.float32)],
        ),
        compiler_params=pltpu.CompilerParams(
            dimension_semantics=("parallel", "arbitrary"),
            vmem_limit_bytes=vmem_limit,
            allow_input_fusion=[True, False, False],
        ),
        cost_estimate=cost,
    )(patches, w_flat, b_flat)

    return out[:M, :D].reshape(B, N, D)


def patch_embedding_ref(x, weight, bias, patch_size):
    """Pure-JAX reference (same math as the PyTorch conv path)."""
    out = jax.lax.conv_general_dilated(
        x, weight,
        window_strides=(patch_size, patch_size),
        padding="VALID",
        dimension_numbers=("NCHW", "OIHW", "NCHW"),
        precision=jax.lax.Precision.HIGHEST,
    )
    out = out + bias.reshape(1, -1, 1, 1)
    B, D, Hp, Wp = out.shape
    return out.reshape(B, D, Hp * Wp).transpose(0, 2, 1)   # flatten(2) + transpose(1,2)


if __name__ == "__main__":
    # Small shapes consistent with the module: image 16x16, patch 4, 4 in-ch, 32 out-ch.
    batch = 2
    in_channels = 4
    image_size = 16
    patch_size = 4
    out_channels = 32

    key = jax.random.PRNGKey(0)
    kx, kw, kb = jax.random.split(key, 3)

    x = jax.random.normal(kx, (batch, in_channels, image_size, image_size),
                          dtype=jnp.float32)
    weight = jax.random.normal(
        kw, (out_channels, in_channels, patch_size, patch_size),
        dtype=jnp.float32) * 0.02
    bias = jax.random.normal(kb, (out_channels,), dtype=jnp.float32) * 0.02

    fn = jax.jit(functools.partial(patch_embedding, patch_size=patch_size))
    out = jax.block_until_ready(fn(x, weight, bias))

    # Reference on the same bf16-rounded inputs (the kernel feeds bf16 to the MXU with
    # f32 accumulation), so the comparison isolates kernel correctness.
    x_bf = x.astype(jnp.bfloat16).astype(jnp.float32)
    w_bf = weight.astype(jnp.bfloat16).astype(jnp.float32)
    ref = jax.block_until_ready(patch_embedding_ref(x_bf, w_bf, bias, patch_size))

    assert out.shape == (batch, (image_size // patch_size) ** 2, out_channels), out.shape
    max_err = float(jnp.max(jnp.abs(out - ref)))
    assert max_err < 1e-3, max_err

    print("KERNEL_OK")
</pallas_src>

<mosaic_0001>
module attributes {stable_mosaic.version = 11 : i64} {
  func.func @_patch_embed_kernel(%arg0: i32, %arg1: i32, %arg2: memref<32x128xbf16, #tpu.memory_space<vmem>>, %arg3: memref<128x128xbf16, #tpu.memory_space<vmem>>, %arg4: memref<1x128xf32, #tpu.memory_space<vmem>>, %arg5: memref<32x128xf32, #tpu.memory_space<vmem>>, %arg6: memref<32x128xf32, #tpu.memory_space<vmem>>) attributes {dimension_semantics = [#tpu.dimension_semantics<parallel>, #tpu.dimension_semantics<arbitrary>], iteration_bounds = array<i64: 1, 1>, scalar_prefetch = 0 : i64, scratch_operands = 1 : i64, tpu.core_type = #tpu.core_type<tc>, window_params = [{transform_indices = @transform_0, window_bounds = array<i64: 32, 128>}, {transform_indices = @transform_1, window_bounds = array<i64: 128, 128>}, {pipeline_mode = #tpu.pipeline_mode<synchronous>, transform_indices = @transform_2, window_bounds = array<i64: 1, 128>}, {transform_indices = @transform_3, window_bounds = array<i64: 32, 128>}]} {
    %c0_i32 = arith.constant 0 : i32
    %0 = arith.cmpi eq, %arg1, %c0_i32 : i32
    %1 = arith.extui %0 : i1 to i32
    %c0_i32_0 = arith.constant 0 : i32
    %2 = arith.cmpi ne, %1, %c0_i32_0 : i32
    scf.if %2 {
      %cst_10 = arith.constant 0.000000e+00 : f32
      %12 = vector.broadcast %cst_10 : f32 to vector<32x128xf32>
      %c0_11 = arith.constant 0 : index
      %c0_12 = arith.constant 0 : index
      %13 = vector.load %arg6[%c0_11, %c0_12] : memref<32x128xf32, #tpu.memory_space<vmem>>, vector<32x128xf32>
      tpu.vector_store %arg6[%c0_11, %c0_12], %12 {strides = array<i32>} : memref<32x128xf32, #tpu.memory_space<vmem>>, vector<32x128xf32>,
    } else {
    }
    %c0 = arith.constant 0 : index
    %c0_1 = arith.constant 0 : index
    %3 = vector.load %arg6[%c0, %c0_1] : memref<32x128xf32, #tpu.memory_space<vmem>>, vector<32x128xf32>
    %c0_2 = arith.constant 0 : index
    %c0_3 = arith.constant 0 : index
    %4 = vector.load %arg2[%c0_2, %c0_3] : memref<32x128xbf16, #tpu.memory_space<vmem>>, vector<32x128xbf16>
    %c0_4 = arith.constant 0 : index
    %c0_5 = arith.constant 0 : index
    %5 = vector.load %arg3[%c0_4, %c0_5] : memref<128x128xbf16, #tpu.memory_space<vmem>>, vector<128x128xbf16>
    %cst = arith.constant dense<0.000000e+00> : vector<32x128xf32>
    %6 = tpu.matmul %4, %5, %cst {dimension_numbers = #tpu.dot_dimension_numbers<[1], [0], [0], [1], [0, 0, 1, 1], [], []>} : vector<32x128xbf16>, vector<128x128xbf16>, vector<32x128xf32> -> vector<32x128xf32>
    %7 = arith.addf %3, %6 : vector<32x128xf32>
    %c0_6 = arith.constant 0 : index
    %c0_7 = arith.constant 0 : index
    %8 = vector.load %arg6[%c0_6, %c0_7] : memref<32x128xf32, #tpu.memory_space<vmem>>, vector<32x128xf32>
    tpu.vector_store %arg6[%c0_6, %c0_7], %7 {strides = array<i32>} : memref<32x128xf32, #tpu.memory_space<vmem>>, vector<32x128xf32>,
    %c0_i32_8 = arith.constant 0 : i32
    %9 = arith.cmpi eq, %arg1, %c0_i32_8 : i32
    %10 = arith.extui %9 : i1 to i32
    %c0_i32_9 = arith.constant 0 : i32
    %11 = arith.cmpi ne, %10, %c0_i32_9 : i32
    scf.if %11 {
      %c0_10 = arith.constant 0 : index
      %c0_11 = arith.constant 0 : index
      %12 = vector.load %arg6[%c0_10, %c0_11] : memref<32x128xf32, #tpu.memory_space<vmem>>, vector<32x128xf32>
      %c0_12 = arith.constant 0 : index
      %c0_13 = arith.constant 0 : index
      %13 = vector.load %arg4[%c0_12, %c0_13] : memref<1x128xf32, #tpu.memory_space<vmem>>, vector<1x128xf32>
      %14 = vector.broadcast %13 : vector<1x128xf32> to vector<32x128xf32>
      %15 = arith.addf %12, %14 : vector<32x128xf32>
      %c0_14 = arith.constant 0 : index
      %c0_15 = arith.constant 0 : index
      %16 = vector.load %arg5[%c0_14, %c0_15] : memref<32x128xf32, #tpu.memory_space<vmem>>, vector<32x128xf32>
      tpu.vector_store %arg5[%c0_14, %c0_15], %15 {strides = array<i32>} : memref<32x128xf32, #tpu.memory_space<vmem>>, vector<32x128xf32>,
    } else {
    }
    return
  }
  func.func @transform_0(%arg0: i32, %arg1: i32) -> (i32, i32) {
    %c0_i32 = arith.constant 0 : i32
    return %arg0, %arg1 : i32, i32
  }
  func.func @transform_1(%arg0: i32, %arg1: i32) -> (i32, i32) {
    %c0_i32 = arith.constant 0 : i32
    %c0_i32_0 = arith.constant 0 : i32
    return %arg1, %c0_i32 : i32, i32
  }
  func.func @transform_2(%arg0: i32, %arg1: i32) -> (i32, i32) {
    %c0_i32 = arith.constant 0 : i32
    %c0_i32_0 = arith.constant 0 : i32
    %c0_i32_1 = arith.constant 0 : i32
    return %c0_i32, %c0_i32_0 : i32, i32
  }
  func.func @transform_3(%arg0: i32, %arg1: i32) -> (i32, i32) {
    %c0_i32 = arith.constant 0 : i32
    %c0_i32_0 = arith.constant 0 : i32
    return %arg0, %c0_i32 : i32, i32
  }
}

</mosaic_0001>

<llo_original>
// kernel: patch_embedding.2
$region0: #{patch_embedding.2}
  #allocation0 [shape = 'u32[]', space=smem, size = 0x4, offset = 0x4, fixed_abs, tag = 'smem constant byte address 0x4 - core index']
  #allocation1 [shape = 'u32[144,128]{1,0:T(1,128)}', space=vmem, size = 0x12000, scoped, tag = 'internal scratch']
  #allocation2 [shape = 'f32[32,128]{1,0:T(8,128)}', space=vmem, size = 0x4000, scoped, tag = 'scratch operand']
  #allocation3 [shape = 'u32[2048]{0}', space=vmem, size = 0x2000, scoped, tag = 'scoped memory for patch_embedding.2']
  #allocation4 [shape = 'u32[2048]{0}', space=vmem, size = 0x2000, scoped, tag = 'scoped memory for patch_embedding.2']
  #allocation5 [shape = 'u32[2048]{0}', space=vmem, size = 0x2000, scoped, tag = 'scoped memory for patch_embedding.2']
  #allocation6 [shape = 'u32[2048]{0}', space=vmem, size = 0x2000, scoped, tag = 'scoped memory for patch_embedding.2']
  #allocation7 [shape = 'u32[2048]{0}', space=vmem, size = 0x2000, scoped, tag = 'scoped memory for patch_embedding.2']
  %s0 = inlined_call_operand.vmem [shape: bf16[128,128], index: 0, kind: input, shape index: {}]
  %s1 = inlined_call_operand.vmem [shape: f32[1,128], index: 1, kind: input, shape index: {}]
  %s2 = inlined_call_operand.vmem [shape: bf16[32,64], index: 2, kind: input, shape index: {}]
  %s3 = inlined_call_operand.<no memory space> [shape: bf16[], index: 3, kind: input, shape index: {}]
  %s4 = inlined_call_operand.hbm [shape: f32[32,128], index: 4, kind: output, shape index: {}]
  %s5 = sld [smem:[#allocation0]]
  $region30: #{patch_embedding.2} parent=0
    _
  %s7 = ssub.s32 1, %s5
  %s8 = scalar_select 0, %s7, %s5
  %v9 = vstv %s3
  %v10 = vunpack.i.l.bf16 %v9
  %v12 = vunpack.i.h.bf16 %v9
  $region1: #{patch_embedding.2} parent=0
    #allocation8 [shape = 'u8[16384]{0}', space=vmem, size = 0x4000, scoped, tag = 'output window, operand 0, single buffered']
    #allocation9 [shape = 's32[1]{0}', space=sflag, size = 0x4, scoped, tag = 'scoped memory for patch_embedding.2']
    #allocation10 [shape = 'u8[8192]{0}', space=vmem, size = 0x2000, dematerialized = true, scoped, tag = 'FusionAdapter Buffer %fusion.1 = bf16[32,128]{1,0:T(8,128)(2,1)} fusion(%param_2.1, %param_3), kind=kLoop, calls=%fused_computation.2.clone, metadata={op_name="jit(patch_embedding)/jit(_pad)/pad" stack_frame_id=10}']
    %14 = vsyncpa [#allocation9], 0
    // Predicated region
    $region2: #{patch_embedding.2} parent=1 // pred_check
      _
    $region3: #{patch_embedding.2} parent=1 // pred_check_branch
      %16 = sbr.rel (0) target = $region5
    $region4: #{patch_embedding.2} parent=1 // pred_region
      _
    $region5: #{patch_embedding.2} parent=1 // pred_fallthru
      _
    // Predicated region
    $region6: #{patch_embedding.2} parent=1 // pred_check
      _
    $region7: #{patch_embedding.2} parent=1 // pred_check_branch
      %18 = sbr.rel (0) target = $region9
    $region8: #{patch_embedding.2} parent=1 // pred_region
      _
    $region9: #{patch_embedding.2} parent=1 // pred_fallthru
      _
    // Predicated region
    $region10: #{patch_embedding.2} parent=1 // pred_check
      _
    $region11: #{patch_embedding.2} parent=1 // pred_check_branch
      %20 = sbr.rel (0) target = $region13
    $region12: #{patch_embedding.2} parent=1 // pred_region
      _
    $region13: #{patch_embedding.2} parent=1 // pred_fallthru
      _
    %s22 = sor.u32 255, 127
    %s23 = sand.u32 %s22, 85
    %s24 = sshrl.u32 %s23, 1
    %s25 = sor.u32 %s23, %s24
    %s26 = sand.u32 51, %s25
    %s27 = sshrl.u32 %s26, 2
    %s28 = sor.u32 %s26, %s27
    %s29 = sand.u32 15, %s28
    %v30 = vld [vmem:[%s2] sm:%s29]
    %v31 = vunpack.c.l.bf16 %v30
    %v32 = vunpack.c.h.bf16 %v30
    %v33 = vlaneseq
    %v34 = vand.u32 %v33, 127
    %vm36 = vcmp.lt.s32.totalorder %v34, 64
    %v37 = vsel %vm36, %v31, %v10
    %v38 = vpack.c.bf16 0.0, %v37
    %40 = vst [vmem:[#allocation10] sm:$0xf] %v38
    %s41 = scalar_lea.vmem %s2, 4
    %s43 = sor.u32 255, 127
    %s44 = sand.u32 %s43, 85
    %s45 = sshrl.u32 %s44, 1
    %s46 = sor.u32 %s44, %s45
    %s47 = sand.u32 51, %s46
    %s48 = sshrl.u32 %s47, 2
    %s49 = sor.u32 %s47, %s48
    %s50 = sand.u32 15, %s49
    %v51 = vld [vmem:[%s41] sm:%s50]
    %v52 = vunpack.c.l.bf16 %v51
    %v53 = vunpack.c.h.bf16 %v51
    %v54 = vlaneseq
    %v55 = vand.u32 %v54, 127
    %vm57 = vcmp.lt.s32.totalorder %v55, 64
    %v58 = vsel %vm57, %v52, %v10
    %s59 = scalar_lea.vmem [#allocation10], 4
    %v60 = vpack.c.bf16 0.0, %v58
    %62 = vst [vmem:[%s59] sm:$0xf] %v60
    %s63 = scalar_lea.vmem %s2, 8
    %s65 = sor.u32 255, 127
    %s66 = sand.u32 %s65, 85
    %s67 = sshrl.u32 %s66, 1
    %s68 = sor.u32 %s66, %s67
    %s69 = sand.u32 51, %s68
    %s70 = sshrl.u32 %s69, 2
    %s71 = sor.u32 %s69, %s70
    %s72 = sand.u32 15, %s71
    %v73 = vld [vmem:[%s63] sm:%s72]
    %v74 = vunpack.c.l.bf16 %v73
    %v75 = vunpack.c.h.bf16 %v73
    %v76 = vlaneseq
    %v77 = vand.u32 %v76, 127
    %vm79 = vcmp.lt.s32.totalorder %v77, 64
    %v80 = vsel %vm79, %v74, %v10
    %s81 = scalar_lea.vmem [#allocation10], 8
    %v82 = vpack.c.bf16 0.0, %v80
    %84 = vst [vmem:[%s81] sm:$0xf] %v82
    %s85 = scalar_lea.vmem %s2, 12
    %s87 = sor.u32 255, 127
    %s88 = sand.u32 %s87, 85
    %s89 = sshrl.u32 %s88, 1
    %s90 = sor.u32 %s88, %s89
    %s91 = sand.u32 51, %s90
    %s92 = sshrl.u32 %s91, 2
    %s93 = sor.u32 %s91, %s92
    %s94 = sand.u32 15, %s93
    %v95 = vld [vmem:[%s85] sm:%s94]
    %v96 = vunpack.c.l.bf16 %v95
    %v97 = vunpack.c.h.bf16 %v95
    %v98 = vlaneseq
    %v99 = vand.u32 %v98, 127
    %vm101 = vcmp.lt.s32.totalorder %v99, 64
    %v102 = vsel %vm101, %v96, %v10
    %s103 = scalar_lea.vmem [#allocation10], 12
    %v104 = vpack.c.bf16 0.0, %v102
    %106 = vst [vmem:[%s103] sm:$0xf] %v104
    %p108 = scmp.eq.s32.totalorder 0, 0
    // Predicated region
    $region14: #{patch_embedding.2} parent=1 // pred_check
      %p109 = pneg %p108
    $region15: #{patch_embedding.2} parent=1 // pred_check_branch
      %111 = sbr.rel (%p109) target = $region17
    $region16: #{patch_embedding.2} parent=1 // pred_region
      %112 = vst [vmem:[#allocation2] sm:$0xff] 0.0
      %113 = vst [vmem:[#allocation2 + $0x8] sm:$0xff] 0.0
      %114 = vst [vmem:[#allocation2 + $0x10] sm:$0xff] 0.0
      %115 = vst [vmem:[#allocation2 + $0x18] sm:$0xff] 0.0
    $region17: #{patch_embedding.2} parent=1 // pred_fallthru
      _
    %v116 = vld [vmem:[#allocation2] sm:$0xff]
    %v117 = vld [vmem:[#allocation2 + $0x8] sm:$0xff]
    %v118 = vld [vmem:[#allocation2 + $0x10] sm:$0xff]
    %v119 = vld [vmem:[#allocation2 + $0x18] sm:$0xff]
    %v120 = vld [vmem:[#allocation10] sm:$0xf]
    %v121 = vld [vmem:[#allocation10 + $0x4] sm:$0xf]
    %v122 = vld [vmem:[#allocation10 + $0x8] sm:$0xf]
    %v123 = vld [vmem:[#allocation10 + $0xc] sm:$0xf]
    %v124 = vld [vmem:[%s0] sm:$0xf]
    %v125 = vld [vmem:[%s0 + $0x4] sm:$0xf]
    %v126 = vld [vmem:[%s0 + $0x8] sm:$0xf]
    %v127 = vld [vmem:[%s0 + $0xc] sm:$0xf]
    %v128 = vld [vmem:[%s0 + $0x10] sm:$0xf]
    %v129 = vld [vmem:[%s0 + $0x14] sm:$0xf]
    %v130 = vld [vmem:[%s0 + $0x18] sm:$0xf]
    %v131 = vld [vmem:[%s0 + $0x1c] sm:$0xf]
    %v132 = vld [vmem:[%s0 + $0x20] sm:$0xf]
    %v133 = vld [vmem:[%s0 + $0x24] sm:$0xf]
    %v134 = vld [vmem:[%s0 + $0x28] sm:$0xf]
    %v135 = vld [vmem:[%s0 + $0x2c] sm:$0xf]
    %v136 = vld [vmem:[%s0 + $0x30] sm:$0xf]
    %v137 = vld [vmem:[%s0 + $0x34] sm:$0xf]
    %v138 = vld [vmem:[%s0 + $0x38] sm:$0xf]
    %v139 = vld [vmem:[%s0 + $0x3c] sm:$0xf]
    %v144 = vunpack.c.l.b16 %v120
    %v145 = vunpack.c.l.b16 %v121
    %v146 = vunpack.c.l.b16 %v122
    %v147 = vunpack.c.l.b16 %v123
    %v148 = vpack.c.b16 %v145, %v144
    %v149 = vpack.c.b16 %v147, %v146
    %v168 = vunpack.c.l.b16 %v124
    %v169 = vunpack.c.l.b16 %v125
    %v170 = vunpack.c.l.b16 %v126
    %v171 = vunpack.c.l.b16 %v127
    %v172 = vunpack.c.l.b16 %v128
    %v173 = vunpack.c.l.b16 %v129
    %v174 = vunpack.c.l.b16 %v130
    %v175 = vunpack.c.l.b16 %v131
    %v176 = vunpack.c.l.b16 %v132
    %v177 = vunpack.c.l.b16 %v133
    %v178 = vunpack.c.l.b16 %v134
    %v179 = vunpack.c.l.b16 %v135
    %v180 = vunpack.c.l.b16 %v136
    %v181 = vunpack.c.l.b16 %v137
    %v182 = vunpack.c.l.b16 %v138
    %v183 = vunpack.c.l.b16 %v139
    %v184 = vpack.c.b16 %v169, %v168
    %v185 = vpack.c.b16 %v171, %v170
    %v186 = vpack.c.b16 %v173, %v172
    %v187 = vpack.c.b16 %v175, %v174
    %v188 = vpack.c.b16 %v177, %v176
    %v189 = vpack.c.b16 %v179, %v178
    %v190 = vpack.c.b16 %v181, %v180
    %v191 = vpack.c.b16 %v183, %v182
    %200 = vmatprep.subr.bf16.mxu0 0
    %201 = vmatpush1.bf16.msra.mxu0 %v184
    %202 = vmatprep.subr.bf16.mxu0 0
    %203 = vmatpush1.bf16.msra.mxu0 %v185
    %204 = vmatprep.subr.bf16.mxu0 0
    %205 = vmatpush1.bf16.msra.mxu0 %v186
    %206 = vmatprep.subr.bf16.mxu0 0
    %207 = vmatpush1.bf16.msra.mxu0 %v187
    %208 = vmatprep.subr.bf16.mxu0 0
    %209 = vmatpush1.bf16.msra.mxu0 %v188
    %210 = vmatprep.subr.bf16.mxu0 0
    %211 = vmatpush1.bf16.msra.mxu0 %v189
    %212 = vmatprep.subr.bf16.mxu0 0
    %213 = vmatpush1.bf16.msra.mxu0 %v190
    %214 = vmatprep.subr.bf16.mxu0 0
    %215 = vmatpush1.bf16.msra.mxu0 %v191
    %216 = vmatprep.subr.bf16.mxu0 0
    %217 = vmatpush1.bf16.msra.mxu0 0
    %218 = vmatprep.subr.bf16.mxu0 0
    %219 = vmatpush1.bf16.msra.mxu0 0
    %220 = vmatprep.subr.bf16.mxu0 0
    %221 = vmatpush1.bf16.msra.mxu0 0
    %222 = vmatprep.subr.bf16.mxu0 0
    %223 = vmatpush1.bf16.msra.mxu0 0
    %224 = vmatprep.subr.bf16.mxu0 0
    %225 = vmatpush1.bf16.msra.mxu0 0
    %226 = vmatprep.subr.bf16.mxu0 0
    %227 = vmatpush1.bf16.msra.mxu0 0
    %228 = vmatprep.subr.bf16.mxu0 0
    %229 = vmatpush1.bf16.msra.mxu0 0
    %230 = vmatprep.subr.bf16.mxu0 0
    %231 = vmatpush1.bf16.msra.mxu0 0
    %232 = vmatprep.mubr.bf16.mxu0 0
    %233 = vmatmul.mubr.bf16.gmra.mrb[0].mxu0 %v148
    %v234 = vpop.f32.mrb[0].mxu0
    %v235 = vadd.f32 0.0, %v234
    %v236 = vpop.f32.mrb[0].mxu0
    %v237 = vpop.f32.mrb[0].mxu0
    %v238 = vadd.f32 0.0, %v237
    %v239 = vpop.f32.mrb[0].mxu0
    %240 = vmatprep.mubr.bf16.mxu0 0
    %241 = vmatmul.mubr.bf16.gmra.mrb[0].mxu0 %v149
    %v242 = vpop.f32.mrb[0].mxu0
    %v243 = vadd.f32 0.0, %v242
    %v244 = vpop.f32.mrb[0].mxu0
    %v245 = vpop.f32.mrb[0].mxu0
    %v246 = vadd.f32 0.0, %v245
    %v247 = vpop.f32.mrb[0].mxu0
    %248 = vdwg.mxu0
    %v249 = vadd.f32 %v116, %v235
    %v250 = vadd.f32 %v117, %v238
    %v251 = vadd.f32 %v118, %v243
    %v252 = vadd.f32 %v119, %v246
    %253 = vst [vmem:[#allocation2] sm:$0xff] %v249
    %254 = vst [vmem:[#allocation2 + $0x8] sm:$0xff] %v250
    %255 = vst [vmem:[#allocation2 + $0x10] sm:$0xff] %v251
    %256 = vst [vmem:[#allocation2 + $0x18] sm:$0xff] %v252
    // Predicated region
    $region18: #{patch_embedding.2} parent=1 // pred_check
      %p257 = pneg %p108
    $region19: #{patch_embedding.2} parent=1 // pred_check_branch
      %259 = sbr.rel (%p257) target = $region21
    $region20: #{patch_embedding.2} parent=1 // pred_region
      %v260 = vld [vmem:[#allocation2] sm:$0xff]
      %v261 = vld [vmem:[#allocation2 + $0x8] sm:$0xff]
      %v262 = vld [vmem:[#allocation2 + $0x10] sm:$0xff]
      %v263 = vld [vmem:[#allocation2 + $0x18] sm:$0xff]
      %v264 = vld [vmem:[%s1] sm:$0x1]
      %v266 = vlaneseq
      %v267 = vshrl.u32 %v266, 7
      %v268 = vsub.s32 0, %v267
      %v269 = vrot.slane %v264, %v268
      %v271 = vadd.f32 %v260, %v269
      %v272 = vadd.f32 %v261, %v269
      %v273 = vadd.f32 %v262, %v269
      %v274 = vadd.f32 %v263, %v269
      %275 = vst [vmem:[#allocation8] sm:$0xff] %v271
      %276 = vst [vmem:[#allocation8 + $0x8] sm:$0xff] %v272
      %277 = vst [vmem:[#allocation8 + $0x10] sm:$0xff] %v273
      %278 = vst [vmem:[#allocation8 + $0x18] sm:$0xff] %v274
    $region21: #{patch_embedding.2} parent=1 // pred_fallthru
      _
    // Predicated region
    $region22: #{patch_embedding.2} parent=1 // pred_check
      _
    $region23: #{patch_embedding.2} parent=1 // pred_check_branch
      %280 = sbr.rel (0) target = $region25
    $region24: #{patch_embedding.2} parent=1 // pred_region
      %s282 = ssub.s32 512, 512
      %283 = vsyncadd [#allocation9], %s282
      %s284 = sshll.u32 [#allocation8], 4
      %s285 = int_to_ptr.vmem [resolvable:$true] %s284
      %290 = dma.vmem_to_hbm [thread:$0]  %s285, 512, %s4, [#allocation9], 128, 128, 8
    $region25: #{patch_embedding.2} parent=1 // pred_fallthru
      _
    // Predicated region
    $region26: #{patch_embedding.2} parent=1 // pred_check
      _
    $region27: #{patch_embedding.2} parent=1 // pred_check_branch
      %292 = sbr.rel (0) target = $region29
    $region28: #{patch_embedding.2} parent=1 // pred_region
      %293 = dma.done [#allocation9], 512
    $region29: #{patch_embedding.2} parent=1 // pred_fallthru
      _
    %294 = vsyncpa [#allocation9], 1

</llo_original>
